<compile_context>
chip_gen: v5e
topology: v5e:2x2
jax: 0.10.0
libtpu: 0.0.40
codegen_flags: <defaults>
</compile_context>

<pallas_src>
import functools

import jax
import jax.numpy as jnp
from jax.experimental import pallas as pl
from jax.experimental.pallas import tpu as pltpu

_LANE = 128


def _round_up(x, m):
    return ((x + m - 1) // m) * m


def _pick_tile(total, cands):
    for c in cands:
        if total % c == 0:
            return c
    return total


# ----------------------------------------------------------------------------
# Pallas kernels
# ----------------------------------------------------------------------------

def _conv_relu_kernel(p_ref, w_ref, b_ref, o_ref):
    # bf16 GEMM on the MXU (lane-dense Cout=multiple of 128) + f32 bias + ReLU epilogue.
    acc = jnp.dot(p_ref[...], w_ref[...], preferred_element_type=jnp.float32)
    o_ref[...] = jnp.maximum(acc + b_ref[...], 0.0)


def _lpips_compare_kernel(n, inv_hw, feat_ref, w_ref, o_ref):
    # LPIPS per-layer compare, tiled over HW with a resident (N,1) accumulator.
    # feat_ref holds x-features stacked over y-features along the batch dim.
    step = pl.program_id(0)

    @pl.when(step == 0)
    def _():
        o_ref[...] = jnp.zeros_like(o_ref)

    eps = 1e-10
    f = feat_ref[...]                    # (2N, hw_tile, C) f32
    f0 = f[:n]
    f1 = f[n:]
    inv0 = pl.reciprocal(jnp.sqrt(jnp.sum(f0 * f0, axis=-1, keepdims=True)) + eps)
    inv1 = pl.reciprocal(jnp.sqrt(jnp.sum(f1 * f1, axis=-1, keepdims=True)) + eps)
    d = (f0 * inv0 - f1 * inv1) ** 2
    wd = jnp.sum(d * w_ref[...], axis=-1)                     # (N, hw_tile)
    o_ref[...] += jnp.sum(wd, axis=-1, keepdims=True) * inv_hw  # running spatial mean


def _absdiff_sum_kernel(x_ref, y_ref, o_ref):
    # Per-sample L1 reconstruction sum, tiled over the flattened feature dim.
    @pl.when(pl.program_id(0) == 0)
    def _():
        o_ref[...] = jnp.zeros_like(o_ref)

    o_ref[...] += jnp.sum(jnp.abs(x_ref[...] - y_ref[...]), axis=-1, keepdims=True)


def _kl_kernel(m_ref, lv_ref, o_ref):
    # DiagonalGaussianDistribution.kl(): 0.5 * sum(mu^2 + var - 1 - logvar), tiled over D.
    @pl.when(pl.program_id(0) == 0)
    def _():
        o_ref[...] = jnp.zeros_like(o_ref)

    m = m_ref[...]
    lv = jnp.clip(lv_ref[...], -30.0, 20.0)  # matches the distribution's logvar clamp
    o_ref[...] += 0.5 * jnp.sum(m * m + jnp.exp(lv) - 1.0 - lv, axis=-1, keepdims=True)


# ----------------------------------------------------------------------------
# Pallas wrappers
# ----------------------------------------------------------------------------

def conv3x3_relu(x_nhwc, w_mat, b):
    """3x3 SAME conv + ReLU: im2col in XLA, bf16 GEMM + bias + ReLU in Pallas."""
    N, H, W, Cin = x_nhwc.shape
    K, Cout = w_mat.shape  # K = 9 * Cin, Cout is a multiple of 128 (lane-dense)
    xp = jnp.pad(x_nhwc, ((0, 0), (1, 1), (1, 1), (0, 0)))
    cols = [xp[:, dy:dy + H, dx:dx + W, :] for dy in range(3) for dx in range(3)]
    # TODO(synk): build im2col inside the kernel from a halo'd input block to avoid
    # the 9x HBM patches blowup; kept in XLA here for lowering robustness (bf16 halves it).
    patches = jnp.concatenate(cols, axis=-1).reshape(N * H * W, K).astype(jnp.bfloat16)

    M = N * H * W
    tm = min(512, _round_up(M, 8))          # fixed large tile; never "whole-M" fallback
    M_pad = _round_up(M, tm)
    if M_pad != M:
        patches = jnp.pad(patches, ((0, M_pad - M), (0, 0)))

    out = pl.pallas_call(
        _conv_relu_kernel,
        out_shape=jax.ShapeDtypeStruct((M_pad, Cout), jnp.float32),
        grid=(M_pad // tm,),
        in_specs=[pl.BlockSpec((tm, K), lambda i: (i, 0)),
                  pl.BlockSpec((K, Cout), lambda i: (0, 0)),
                  pl.BlockSpec((1, Cout), lambda i: (0, 0))],
        out_specs=pl.BlockSpec((tm, Cout), lambda i: (i, 0)),
        compiler_params=pltpu.CompilerParams(
            dimension_semantics=("parallel",),
            vmem_limit_bytes=64 * 1024 * 1024),
        cost_estimate=pl.CostEstimate(
            flops=2 * M_pad * K * Cout,
            transcendentals=0,
            bytes_accessed=M_pad * K * 2 + K * Cout * 2 + Cout * 4 + M_pad * Cout * 4),
    )(patches, w_mat.astype(jnp.bfloat16), b.reshape(1, Cout).astype(jnp.float32))
    return out[:M].reshape(N, H, W, Cout)


def lpips_compare(feats, lin_w, n):
    """feats: (2N, HW, C) with x-features stacked over y-features; returns (N, 1)."""
    twoN, HW, C = feats.shape
    hw_tile = _pick_tile(HW, (512, 256, 128, 64, 32, 16, 8))
    kern = functools.partial(_lpips_compare_kernel, n, 1.0 / float(HW))
    return pl.pallas_call(
        kern,
        out_shape=jax.ShapeDtypeStruct((n, 1), jnp.float32),
        grid=(HW // hw_tile,),
        in_specs=[pl.BlockSpec((twoN, hw_tile, C), lambda i: (0, i, 0)),
                  pl.BlockSpec((1, 1, C), lambda i: (0, 0, 0))],
        out_specs=pl.BlockSpec((n, 1), lambda i: (0, 0)),
        compiler_params=pltpu.CompilerParams(
            dimension_semantics=("arbitrary",),
            vmem_limit_bytes=64 * 1024 * 1024),
    )(feats, lin_w.reshape(1, 1, C))


def _tiled_rowsum_call(kernel, a, b):
    """Shared driver for per-sample reductions: tile D, accumulate into resident (N,1)."""
    N = a.shape[0]
    af = a.reshape(N, -1).astype(jnp.float32)
    bf = b.reshape(N, -1).astype(jnp.float32)
    D = af.shape[1]
    D_pad = _round_up(D, _LANE)
    if D_pad != D:
        af = jnp.pad(af, ((0, 0), (0, D_pad - D)))  # zero pad contributes 0 to both sums
        bf = jnp.pad(bf, ((0, 0), (0, D_pad - D)))
    td = _pick_tile(D_pad, (8192, 4096, 2048, 1024, 512, 256, 128))
    return pl.pallas_call(
        kernel,
        out_shape=jax.ShapeDtypeStruct((N, 1), jnp.float32),
        grid=(D_pad // td,),
        in_specs=[pl.BlockSpec((N, td), lambda i: (0, i)),
                  pl.BlockSpec((N, td), lambda i: (0, i))],
        out_specs=pl.BlockSpec((N, 1), lambda i: (0, 0)),
        compiler_params=pltpu.CompilerParams(
            dimension_semantics=("arbitrary",),
            vmem_limit_bytes=64 * 1024 * 1024),
    )(af, bf)


def per_sample_abs_sum(x, y):
    return _tiled_rowsum_call(_absdiff_sum_kernel, x, y)


def per_sample_kl(mean, logvar):
    return _tiled_rowsum_call(_kl_kernel, mean, logvar)


# ----------------------------------------------------------------------------
# LPIPS perceptual loss (synthetic small VGG-like feature net)
# ----------------------------------------------------------------------------
# TODO(synk): the pretrained ImageNet VGG16 inside LPIPS cannot be loaded here
# (no checkpoint files allowed); it is replaced by a deterministic 3-stage
# conv/ReLU/maxpool extractor with the same compare/lin/spatial-average math.

_LPIPS_SHIFT = jnp.array([-0.030, -0.088, -0.188], jnp.float32).reshape(1, 3, 1, 1)
_LPIPS_SCALE = jnp.array([0.458, 0.448, 0.450], jnp.float32).reshape(1, 3, 1, 1)
_LPIPS_CHANS = [(3, 64), (64, 128), (128, 128)]  # logical channels (VGG-ish)


def init_lpips_params(key):
    """Weights stored at lane-dense padded shapes (Cout padded to 128, zero pad)."""
    params = []
    cin_pad = 3  # image channels: only a GEMM-K dim, no lane padding needed
    for (cin, cout) in _LPIPS_CHANS:
        cout_pad = _round_up(cout, _LANE)
        key, k1, k2, k3 = jax.random.split(key, 4)
        w = jax.random.normal(k1, (9, cin, cout), jnp.float32) / jnp.sqrt(9.0 * cin)
        b = 0.01 * jax.random.normal(k2, (cout,), jnp.float32)
        lin = 0.1 * jnp.abs(jax.random.normal(k3, (cout,), jnp.float32))
        w_full = jnp.zeros((9, cin_pad, cout_pad), jnp.float32).at[:, :cin, :cout].set(w)
        b_full = jnp.zeros((cout_pad,), jnp.float32).at[:cout].set(b)
        lin_full = jnp.zeros((cout_pad,), jnp.float32).at[:cout].set(lin)
        params.append((w_full.reshape(9 * cin_pad, cout_pad), b_full, lin_full))
        cin_pad = cout_pad
    return params


def _maxpool2x2(x_nhwc):
    N, H, W, C = x_nhwc.shape
    return jnp.max(x_nhwc.reshape(N, H // 2, 2, W // 2, 2, C), axis=(2, 4))


def lpips_perceptual(x_nchw, y_nchw, params):
    # ScalingLayer (tiny elementwise shift/scale glue), then NHWC; fuse x/y into one
    # stacked batch so every conv layer is a single Pallas GEMM call.
    x = jnp.transpose((x_nchw - _LPIPS_SHIFT) / _LPIPS_SCALE, (0, 2, 3, 1))
    y = jnp.transpose((y_nchw - _LPIPS_SHIFT) / _LPIPS_SCALE, (0, 2, 3, 1))
    N = x.shape[0]
    feats = jnp.concatenate([x, y], axis=0)   # (2N, H, W, 3)
    p = jnp.zeros((N, 1), jnp.float32)
    for li, (w, b, lin) in enumerate(params):
        feats = conv3x3_relu(feats, w, b)
        C = feats.shape[-1]
        p = p + lpips_compare(feats.reshape(2 * N, -1, C), lin, N)
        if li + 1 < len(params):
            feats = _maxpool2x2(feats)
    return p  # (N, 1): equivalent of LPIPS's per-sample (N,1,1,1) output


# ----------------------------------------------------------------------------
# LPIPS_loss_KL forward
# ----------------------------------------------------------------------------

def lpips_loss_kl_forward(inputs, reconstructions, post_mean, post_logvar,
                          lpips_params, logvar_init=0.0, kl_weight=1.0,
                          perceptual_weight=1.0, split='train'):
    # TODO(synk): only the weights=None branch is implemented (weighted path is
    # identical to nll_loss in that case, as in the reference module).
    N, C, H, W = inputs.shape
    CHW = C * H * W
    logvar = jnp.asarray(logvar_init, jnp.float32)  # nn.Parameter(ones(())*logvar_init)

    abs_sum = per_sample_abs_sum(inputs, reconstructions)             # (N,1) sum|x-y|
    p_loss = lpips_perceptual(inputs, reconstructions, lpips_params)  # (N,1)
    kl_per = per_sample_kl(post_mean, post_logvar)                    # (N,1)

    # rec_loss = |x-y| + pw * p_loss (p_loss broadcasts over C,H,W) — reduced exactly.
    rec_sum = jnp.sum(abs_sum) + perceptual_weight * CHW * jnp.sum(p_loss)
    nll_sum = rec_sum / jnp.exp(logvar) + logvar * (N * CHW)
    nll_loss = nll_sum / N
    weighted_nll_loss = nll_loss
    kl_loss = jnp.sum(kl_per) / N
    loss = weighted_nll_loss + kl_weight * kl_loss
    rec_loss_mean = rec_sum / (N * CHW)

    log = {
        '{}/total_loss'.format(split): loss,
        '{}/logvar'.format(split): logvar,
        '{}/kl_loss'.format(split): kl_loss,
        '{}/nll_loss'.format(split): nll_loss,
        '{}/rec_loss'.format(split): rec_loss_mean,
    }
    return loss, log


# ----------------------------------------------------------------------------

if __name__ == "__main__":
    key = jax.random.PRNGKey(0)
    k1, k2, k3, k4, kp = jax.random.split(key, 5)

    N, C, H, W = 2, 3, 16, 16          # RGB images (LPIPS expects 3 channels)
    Zc, Zh, Zw = 4, 4, 4               # latent posterior shape

    inputs = jax.random.normal(k1, (N, C, H, W), jnp.float32)
    reconstructions = jax.random.normal(k2, (N, C, H, W), jnp.float32)
    post_mean = jax.random.normal(k3, (N, Zc, Zh, Zw), jnp.float32)
    post_logvar = jax.random.normal(k4, (N, Zc, Zh, Zw), jnp.float32)

    lpips_params = init_lpips_params(kp)

    loss, log = lpips_loss_kl_forward(inputs, reconstructions,
                                      post_mean, post_logvar, lpips_params)
    jax.block_until_ready(loss)
    for v in log.values():
        jax.block_until_ready(v)
    print("KERNEL_OK")
</pallas_src>

<mosaic_0001>
module attributes {stable_mosaic.version = 11 : i64} {
  func.func @_absdiff_sum_kernel(%arg0: i32, %arg1: memref<2x256xf32, #tpu.memory_space<vmem>>, %arg2: memref<2x256xf32, #tpu.memory_space<vmem>>, %arg3: memref<2x1xf32, #tpu.memory_space<vmem>>) attributes {dimension_semantics = [#tpu.dimension_semantics<arbitrary>], iteration_bounds = array<i64: 3>, scalar_prefetch = 0 : i64, scratch_operands = 0 : i64, tpu.core_type = #tpu.core_type<tc>, window_params = [{transform_indices = @transform_0, window_bounds = array<i64: 2, 256>}, {transform_indices = @transform_1, window_bounds = array<i64: 2, 256>}, {pipeline_mode = #tpu.pipeline_mode<synchronous>, transform_indices = @transform_2, window_bounds = array<i64: 2, 1>}]} {
    %c0_i32 = arith.constant 0 : i32
    %0 = arith.cmpi eq, %arg0, %c0_i32 : i32
    %1 = arith.extui %0 : i1 to i32
    %c0_i32_0 = arith.constant 0 : i32
    %2 = arith.cmpi ne, %1, %c0_i32_0 : i32
    scf.if %2 {
      %cst_8 = arith.constant 0.000000e+00 : f32
      %12 = vector.broadcast %cst_8 : f32 to vector<2x1xf32>
      %c0_9 = arith.constant 0 : index
      %c0_10 = arith.constant 0 : index
      %13 = vector.load %arg3[%c0_9, %c0_10] : memref<2x1xf32, #tpu.memory_space<vmem>>, vector<2x1xf32>
      tpu.vector_store %arg3[%c0_9, %c0_10], %12 {strides = array<i32>} : memref<2x1xf32, #tpu.memory_space<vmem>>, vector<2x1xf32>,
    } else {
    }
    %c0 = arith.constant 0 : index
    %c0_1 = arith.constant 0 : index
    %3 = vector.load %arg3[%c0, %c0_1] : memref<2x1xf32, #tpu.memory_space<vmem>>, vector<2x1xf32>
    %c0_2 = arith.constant 0 : index
    %c0_3 = arith.constant 0 : index
    %4 = vector.load %arg1[%c0_2, %c0_3] : memref<2x256xf32, #tpu.memory_space<vmem>>, vector<2x256xf32>
    %c0_4 = arith.constant 0 : index
    %c0_5 = arith.constant 0 : index
    %5 = vector.load %arg2[%c0_4, %c0_5] : memref<2x256xf32, #tpu.memory_space<vmem>>, vector<2x256xf32>
    %6 = arith.subf %4, %5 : vector<2x256xf32>
    %7 = math.absf %6 : vector<2x256xf32>
    %cst = arith.constant dense<0.000000e+00> : vector<2xf32>
    %8 = vector.multi_reduction <add>, %7, %cst [1] : vector<2x256xf32> to vector<2xf32>
    %9 = vector.shape_cast %8 : vector<2xf32> to vector<2x1xf32>
    %10 = arith.addf %3, %9 : vector<2x1xf32>
    %c0_6 = arith.constant 0 : index
    %c0_7 = arith.constant 0 : index
    %11 = vector.load %arg3[%c0_6, %c0_7] : memref<2x1xf32, #tpu.memory_space<vmem>>, vector<2x1xf32>
    tpu.vector_store %arg3[%c0_6, %c0_7], %10 {strides = array<i32>} : memref<2x1xf32, #tpu.memory_space<vmem>>, vector<2x1xf32>,
    return
  }
  func.func @transform_0(%arg0: i32) -> (i32, i32) {
    %c0_i32 = arith.constant 0 : i32
    %c0_i32_0 = arith.constant 0 : i32
    return %c0_i32, %arg0 : i32, i32
  }
  func.func @transform_1(%arg0: i32) -> (i32, i32) {
    %c0_i32 = arith.constant 0 : i32
    %c0_i32_0 = arith.constant 0 : i32
    return %c0_i32, %arg0 : i32, i32
  }
  func.func @transform_2(%arg0: i32) -> (i32, i32) {
    %c0_i32 = arith.constant 0 : i32
    %c0_i32_0 = arith.constant 0 : i32
    %c0_i32_1 = arith.constant 0 : i32
    return %c0_i32, %c0_i32_0 : i32, i32
  }
}

</mosaic_0001>

<llo_original>
// kernel: tpu_custom_call.1
$region0: #{tpu_custom_call.1}
  #allocation0 [shape = 'u32[]', space=smem, size = 0x4, offset = 0x4, fixed_abs, tag = 'smem constant byte address 0x4 - core index']
  #allocation1 [shape = 'u32[72,128]{1,0:T(1,128)}', space=vmem, size = 0x9000, scoped, tag = 'internal scratch']
  %s0 = inlined_call_operand.hbm [shape: f32[2,768], index: 0, kind: input, shape index: {}]
  %s1 = inlined_call_operand.hbm [shape: f32[2,768], index: 1, kind: input, shape index: {}]
  %s2 = inlined_call_operand.vmem [shape: f32[2,1], index: 2, kind: output, shape index: {}]
  %s3 = sld [smem:[#allocation0]]
  $region53: #{tpu_custom_call.1} parent=0
    _
  %s5 = ssub.s32 1, %s3
  %s6 = scalar_select 0, %s5, %s3
  $region1: #{tpu_custom_call.1} parent=0
    #allocation2 [shape = 'u8[4096]{0}', space=vmem, size = 0x1000, scoped, tag = 'input window, operand 0']
    #allocation3 [shape = 's32[2]{0}', space=sflag, size = 0x8, scoped, tag = 'scoped memory for tpu_custom_call.1']
    #allocation4 [shape = 'u8[4096]{0}', space=vmem, size = 0x1000, scoped, tag = 'input window, operand 1']
    #allocation5 [shape = 's32[2]{0}', space=sflag, size = 0x8, scoped, tag = 'scoped memory for tpu_custom_call.1']
    %7 = vsyncpa [#allocation3], 0
    %s8 = scalar_lea.sflag [#allocation3], 1
    %9 = vsyncpa %s8, 0
    %10 = vsyncpa [#allocation5], 0
    %s11 = scalar_lea.sflag [#allocation5], 1
    %12 = vsyncpa %s11, 0
    loop: start=0, step=1, limit=5
    $region2: #{tpu_custom_call.1} parent=1 // loop_pre_header
      _
    $region3: #{tpu_custom_call.1} parent=1 // loop_header
      %s14 = sphi 0, %s18
      %p15 = scmp.ge.s32.totalorder %s14, 5
      %s24 = sphi 0, %s26
      %s27 = sphi 0, %s24
      %s28 = sphi 0, %s27
      %s44 = sphi 0, %s28
      %s50 = sphi 0, %s52
      %s53 = sphi 0, %s50
      %s54 = sphi 0, %s53
      %s70 = sphi 0, %s54
      %s74 = sphi 0, %s74
      %s76 = sphi 0, %s74
      %s77 = sphi 0, %s76
      %s91 = sphi 0, %s77
    $region4: #{tpu_custom_call.1} parent=1 // loop_header_branch
      %17 = sbr.rel (%p15) target = $region8
    $region5: #{tpu_custom_call.1} parent=1 // loop_body
      %s19 = ssub.s32 %s14, 1
      %s20 = ssub.s32 %s14, 2
      %s21 = sadd.s32 %s14, 1
      %s22 = ssub.s32 %s14, %s21
      %p23 = scmp.eq.s32.totalorder %s22, 0
      %s25 = sadd.s32 %s24, 1
      %s26 = scalar_select %p23, %s24, %s25
      %p29 = pneg %p23
      %p30 = scmp.eq.s32.totalorder %s14, 2
      %p31 = por %p29, %p30
      %p32 = scmp.ne.s32.totalorder %s24, %s27
      %p33 = scmp.eq.s32.totalorder %s14, 0
      %p34 = por %p32, %p33
      %p35 = scmp.ne.s32.totalorder %s24, %s27
      %p36 = scmp.eq.s32.totalorder %s19, 2
      %p37 = por %p35, %p36
      %p38 = scmp.ne.s32.totalorder %s27, %s28
      %p39 = scmp.eq.s32.totalorder %s19, 0
      %p40 = por %p38, %p39
      %p41 = scmp.ne.s32.totalorder %s27, %s28
      %p42 = scmp.eq.s32.totalorder %s20, 2
      %p43 = por %p41, %p42
      %p45 = scmp.ne.s32.totalorder %s28, %s44
      %p46 = scmp.eq.s32.totalorder %s20, 0
      %p47 = por %p45, %p46
      %s48 = ssub.s32 %s14, %s21
      %p49 = scmp.eq.s32.totalorder %s48, 0
      %s51 = sadd.s32 %s50, 1
      %s52 = scalar_select %p49, %s50, %s51
      %p55 = pneg %p49
      %p56 = scmp.eq.s32.totalorder %s14, 2
      %p57 = por %p55, %p56
      %p58 = scmp.ne.s32.totalorder %s50, %s53
      %p59 = scmp.eq.s32.totalorder %s14, 0
      %p60 = por %p58, %p59
      %p61 = scmp.ne.s32.totalorder %s50, %s53
      %p62 = scmp.eq.s32.totalorder %s19, 2
      %p63 = por %p61, %p62
      %p64 = scmp.ne.s32.totalorder %s53, %s54
      %p65 = scmp.eq.s32.totalorder %s19, 0
      %p66 = por %p64, %p65
      %p67 = scmp.ne.s32.totalorder %s53, %s54
      %p68 = scmp.eq.s32.totalorder %s20, 2
      %p69 = por %p67, %p68
      %p71 = scmp.ne.s32.totalorder %s54, %s70
      %p72 = scmp.eq.s32.totalorder %s20, 0
      %p73 = por %p71, %p72
      %s75 = sadd.s32 %s74, 1
      %p78 = scmp.eq.s32.totalorder %s14, 2
      %p79 = scmp.ne.s32.totalorder %s74, %s76
      %p80 = scmp.eq.s32.totalorder %s14, 0
      %p81 = por %p79, %p80
      %p82 = scmp.ne.s32.totalorder %s74, %s76
      %p83 = scmp.eq.s32.totalorder %s19, 2
      %p84 = por %p82, %p83
      %p85 = scmp.ne.s32.totalorder %s76, %s77
      %p86 = scmp.eq.s32.totalorder %s19, 0
      %p87 = por %p85, %p86
      %p88 = scmp.ne.s32.totalorder %s76, %s77
      %p89 = scmp.eq.s32.totalorder %s20, 2
      %p90 = por %p88, %p89
      %p92 = scmp.ne.s32.totalorder %s77, %s91
      %p93 = scmp.eq.s32.totalorder %s20, 0
      %p94 = por %p92, %p93
      %p95 = scmp.le.s32.totalorder 1, %s14
      %p96 = scmp.lt.s32.totalorder %s14, 4
      %p97 = pnand %p95, %p96
      %p98 = pneg %p97
      // Predicated region
      $region9: #{tpu_custom_call.1} parent=5 // pred_check
        _
      $region10: #{tpu_custom_call.1} parent=5 // pred_check_branch
        %100 = sbr.rel (%p97) target = $region12
      $region11: #{tpu_custom_call.1} parent=5 // pred_region
        %s101 = ssub.s32 %s14, 1
      $region12: #{tpu_custom_call.1} parent=5 // pred_fallthru
        _
      %p102 = scmp.lt.s32.totalorder %s14, 3
      // Predicated region
      $region13: #{tpu_custom_call.1} parent=5 // pred_check
        %p103 = pneg %p102
      $region14: #{tpu_custom_call.1} parent=5 // pred_check_branch
        %105 = sbr.rel (%p103) target = $region16
      $region15: #{tpu_custom_call.1} parent=5 // pred_region
        // Predicated region
        $region17: #{tpu_custom_call.1} parent=15 // pred_check
          %p106 = pneg %p34
        $region18: #{tpu_custom_call.1} parent=15 // pred_check_branch
          %108 = sbr.rel (%p106) target = $region20
        $region19: #{tpu_custom_call.1} parent=15 // pred_region
          %s109 = sand.u32 %s24, 1
          %s110 = scalar_lea.sflag [#allocation3], %s109
          %s111 = sand.u32 %s24, 1
          %s112 = smul.addr %s111, 4
          %s113 = scalar_lea.vmem [#allocation2], %s112
          %s114 = smul.u32 2, %s14
          %116 = vsyncadd %s110, 0
          %s117 = smul.addr %s114, 2
          %s118 = scalar_lea.hbm %s0, %s117
          %s120 = sshll.u32 %s118, 4
          %s121 = int_to_ptr.hbm [resolvable:$true] %s120
          %s122 = sshll.u32 %s113, 4
          %s123 = int_to_ptr.vmem [resolvable:$true] %s122
          %125 = dma.hbm_to_vmem [thread:$0]  %s121, 64, %s123, %s110
        $region20: #{tpu_custom_call.1} parent=15 // pred_fallthru
          _
        // Predicated region
        $region21: #{tpu_custom_call.1} parent=15 // pred_check
          %p126 = pneg %p60
        $region22: #{tpu_custom_call.1} parent=15 // pred_check_branch
          %128 = sbr.rel (%p126) target = $region24
        $region23: #{tpu_custom_call.1} parent=15 // pred_region
          %s129 = sand.u32 %s50, 1
          %s130 = scalar_lea.sflag [#allocation5], %s129
          %s131 = sand.u32 %s50, 1
          %s132 = smul.addr %s131, 4
          %s133 = scalar_lea.vmem [#allocation4], %s132
          %s134 = smul.u32 2, %s14
          %136 = vsyncadd %s130, 0
          %s137 = smul.addr %s134, 2
          %s138 = scalar_lea.hbm %s1, %s137
          %s140 = sshll.u32 %s138, 4
          %s141 = int_to_ptr.hbm [resolvable:$true] %s140
          %s142 = sshll.u32 %s133, 4
          %s143 = int_to_ptr.vmem [resolvable:$true] %s142
          %145 = dma.hbm_to_vmem [thread:$0]  %s141, 64, %s143, %s130
        $region24: #{tpu_custom_call.1} parent=15 // pred_fallthru
          _
      $region16: #{tpu_custom_call.1} parent=5 // pred_fallthru
        _
      %p146 = scmp.le.s32.totalorder 1, %s14
      %p147 = scmp.lt.s32.totalorder %s14, 4
      %p148 = pnand %p146, %p147
      %p149 = pneg %p148
      // Predicated region
      $region25: #{tpu_custom_call.1} parent=5 // pred_check
        _
      $region26: #{tpu_custom_call.1} parent=5 // pred_check_branch
        %151 = sbr.rel (%p148) target = $region28
      $region27: #{tpu_custom_call.1} parent=5 // pred_region
        %s152 = ssub.s32 %s14, 1
        %s153 = sand.u32 %s27, 1
        %s154 = scalar_lea.sflag [#allocation3], %s153
        %s155 = sand.u32 %s27, 1
        %s156 = smul.addr %s155, 4
        %s157 = scalar_lea.vmem [#allocation2], %s156
        // Predicated region
        $region29: #{tpu_custom_call.1} parent=27 // pred_check
          %p158 = pneg %p40
        $region30: #{tpu_custom_call.1} parent=27 // pred_check_branch
          %160 = sbr.rel (%p158) target = $region32
        $region31: #{tpu_custom_call.1} parent=27 // pred_region
          %162 = dma.done %s154, 64
        $region32: #{tpu_custom_call.1} parent=27 // pred_fallthru
          _
        %s163 = sand.u32 %s53, 1
        %s164 = scalar_lea.sflag [#allocation5], %s163
        %s165 = sand.u32 %s53, 1
        %s166 = smul.addr %s165, 4
        %s167 = scalar_lea.vmem [#allocation4], %s166
        // Predicated region
        $region33: #{tpu_custom_call.1} parent=27 // pred_check
          %p168 = pneg %p66
        $region34: #{tpu_custom_call.1} parent=27 // pred_check_branch
          %170 = sbr.rel (%p168) target = $region36
        $region35: #{tpu_custom_call.1} parent=27 // pred_region
          %172 = dma.done %s164, 64
        $region36: #{tpu_custom_call.1} parent=27 // pred_fallthru
          _
        %s173 = sand.u32 %s27, 1
        %s174 = scalar_lea.sflag [#allocation3], %s173
        %s175 = sand.u32 %s27, 1
        %s176 = smul.addr %s175, 4
        %s177 = scalar_lea.vmem [#allocation2], %s176
        %p178 = pneg %p40
        %p179 = pneg %p37
        %s180 = sand.u32 %s53, 1
        %s181 = scalar_lea.sflag [#allocation5], %s180
        %s182 = sand.u32 %s53, 1
        %s183 = smul.addr %s182, 4
        %s184 = scalar_lea.vmem [#allocation4], %s183
        %p185 = pneg %p66
        %p186 = pneg %p63
        %p187 = pneg %p87
        %p188 = pneg %p84
        %s189 = smul.u32 2, %s19
        %s190 = smul.u32 2, %s19
        %p191 = scmp.eq.s32.totalorder %s19, 0
        // Predicated region
        $region37: #{tpu_custom_call.1} parent=27 // pred_check
          %p192 = pneg %p191
        $region38: #{tpu_custom_call.1} parent=27 // pred_check_branch
          %194 = sbr.rel (%p192) target = $region40
        $region39: #{tpu_custom_call.1} parent=27 // pred_region
          %vm195 = vcmask 1024
          %196 = vst.msk [vmem:[%s2] sm:$0x3] %vm195, 0.0
        $region40: #{tpu_custom_call.1} parent=27 // pred_fallthru
          _
        %v197 = vld [vmem:[%s2] sm:$0x3]
        %v198 = vld [vmem:[%s157] sm:$0xf]
        %v199 = vld [vmem:[%s167] sm:$0xf]
        %v200 = vsub.f32 %v198, %v199
        %v201 = vand.u32 2147483647, %v200
        %203 = vst [vmem:[#allocation1] ss:$4 sm:$0xff] %v201
        %v204 = vld.sshfl [vmem:[#allocation1] sm:$0xff pattern:$0x73625140]
        %v205 = vld.sshfl [vmem:[#allocation1 + $0x8] sm:$0xff pattern:$0x73625140]
        %vm208 = vcmask 1041408
        %v209 = vsel %vm208, %v204, 0.0
        %v210 = vsel %vm208, %v205, 0.0
        %v211 = vadd.f32 %v209, %v210
        %212 = vadd.xlane.f32.xlu0 %v211
        %v213 = vpop.xlane.xlu0 %212
        %v214 = vadd.f32 %v197, %v213
        %vm215 = vcmask 1024
        %216 = vst.msk [vmem:[%s2] sm:$0x3] %vm215, %v214
        // Predicated region
        $region41: #{tpu_custom_call.1} parent=27 // pred_check
          %p217 = pneg %p84
        $region42: #{tpu_custom_call.1} parent=27 // pred_check_branch
          %219 = sbr.rel (%p217) target = $region44
        $region43: #{tpu_custom_call.1} parent=27 // pred_region
          _
        $region44: #{tpu_custom_call.1} parent=27 // pred_fallthru
          _
        // Predicated region
        $region45: #{tpu_custom_call.1} parent=27 // pred_check
          %p220 = pneg %p84
        $region46: #{tpu_custom_call.1} parent=27 // pred_check_branch
          %222 = sbr.rel (%p220) target = $region48
        $region47: #{tpu_custom_call.1} parent=27 // pred_region
          _
        $region48: #{tpu_custom_call.1} parent=27 // pred_fallthru
          _
      $region28: #{tpu_custom_call.1} parent=5 // pred_fallthru
        _
      %p223 = scmp.le.s32.totalorder 2, %s14
      // Predicated region
      $region49: #{tpu_custom_call.1} parent=5 // pred_check
        %p224 = pneg %p223
      $region50: #{tpu_custom_call.1} parent=5 // pred_check_branch
        %226 = sbr.rel (%p224) target = $region52
      $region51: #{tpu_custom_call.1} parent=5 // pred_region
        %s227 = ssub.s32 %s14, 2
      $region52: #{tpu_custom_call.1} parent=5 // pred_fallthru
        _
    $region6: #{tpu_custom_call.1} parent=1 // loop_footer
      %s18 = sadd.s32 1, %s14
    $region7: #{tpu_custom_call.1} parent=1 // loop_footer_branch
      %13 = sbr.rel target = $region3
    $region8: #{tpu_custom_call.1} parent=1 // loop_exit
      _
    %228 = vsyncpa [#allocation3], 1
    %s229 = scalar_lea.sflag [#allocation3], 1
    %230 = vsyncpa %s229, 1
    %231 = vsyncpa [#allocation5], 1
    %s232 = scalar_lea.sflag [#allocation5], 1
    %233 = vsyncpa %s232, 1

</llo_original>
